<compile_context>
chip_gen: v7x
topology: tpu7x:2x2x1
jax: 0.10.0
libtpu: 0.0.40
codegen_flags: <defaults>
</compile_context>

<pallas_src>
import math

import jax
import jax.numpy as jnp
from jax.experimental import pallas as pl
from jax.experimental.pallas import tpu as pltpu


# ---------------------------------------------------------------------------
# VMEM budgeting (per generation).
# ---------------------------------------------------------------------------
def _vmem_capacity_bytes():
    try:
        info = pltpu.get_tpu_info()
        cap = int(getattr(info, "vmem_capacity_bytes", 0))
        if cap > 0:
            return cap
    except Exception:
        pass
    return 64 << 20  # conservative default (v7x per-TensorCore)


_VMEM_CAP = _vmem_capacity_bytes()
_VMEM_LIMIT = min((_VMEM_CAP * 3) // 4, 100 << 20)   # scoped VMEM we request
_TILE_BUDGET = _VMEM_LIMIT // 2                      # for double-buffered tiles
_MAX_TILE_HW = 32768                                 # lane-tile upper cap
_WHOLE_LEVEL_BYTES = 8 << 20                         # "tiny level" threshold


# ---------------------------------------------------------------------------
# Kernels.
# ---------------------------------------------------------------------------
def _neck_tile_kernel(x_ref, w_ref, b_ref, o_ref):
    # x_ref: (C_in, T)     one batch element's tile, H*W on lanes
    # w_ref: (C_out, C_in) 1x1 conv weight with BN scale folded in
    # b_ref: (C_out, 1)    folded BN bias
    # o_ref: (C_out, T)
    y = jnp.dot(w_ref[...], x_ref[...], preferred_element_type=jnp.float32)
    o_ref[...] = jnp.maximum(y + b_ref[...], 0.0).astype(o_ref.dtype)


def _neck_whole_kernel(x_ref, w_ref, b_ref, o_ref):
    # Entire (tiny) level in one grid step.
    # x_ref: (N, C_in, HW), o_ref: (N, C_out, HW); N is small and static here.
    w = w_ref[...]
    b = b_ref[...]
    for i in range(x_ref.shape[0]):
        y = jnp.dot(w, x_ref[i], preferred_element_type=jnp.float32)
        o_ref[i] = jnp.maximum(y + b, 0.0).astype(o_ref.dtype)


# ---------------------------------------------------------------------------
# Tiling plan.
# ---------------------------------------------------------------------------
def _sublane_pad(c):
    # f32 sublane padding (physical rows padded to a multiple of 8).
    return max(8, ((c + 7) // 8) * 8)


def _plan_level(n, c_in, c_out, hw):
    """Return ("whole", None) or ("tiled", tile_hw)."""
    c_in_p = _sublane_pad(c_in)
    c_out_p = _sublane_pad(c_out)
    level_bytes = n * hw * (c_in_p + c_out_p) * 4
    if 2 * level_bytes <= min(_WHOLE_LEVEL_BYTES, _TILE_BUDGET):
        # Overhead-dominated level: one grid step for the whole thing.
        return "whole", None
    if hw < 128:
        # Rare: large level with tiny spatial extent -> full-extent lane block.
        # (Sub-128-lane masked stores; acceptable for this corner case.)
        return "tiled", hw
    per_lane = 2 * 4 * (c_in_p + c_out_p)            # double-buffered in+out
    t_max = max(128, (_TILE_BUDGET // per_lane) // 128 * 128)
    tile = min(_MAX_TILE_HW, t_max, (hw // 128) * 128)
    # Keep >= 2 grid steps so both v7x TensorCores get work.
    if n * (-(-hw // tile)) < 2 and tile >= 256:
        tile = max(128, (tile // 2) // 128 * 128)
    return "tiled", tile


# ---------------------------------------------------------------------------
# pallas_call wrappers.
# ---------------------------------------------------------------------------
def _pallas_tiled(x3, w_fold, bias_col, tile_hw):
    n, c_in, hw = x3.shape
    c_out = w_fold.shape[0]
    grid = (n, -(-hw // tile_hw))      # ragged: trailing block may be partial
    flops = 2 * n * hw * c_in * c_out
    bytes_accessed = 4 * (n * hw * (c_in + c_out) + c_out * (c_in + 1))
    return pl.pallas_call(
        _neck_tile_kernel,
        out_shape=jax.ShapeDtypeStruct((n, c_out, hw), x3.dtype),
        grid_spec=pltpu.PrefetchScalarGridSpec(
            num_scalar_prefetch=0,
            grid=grid,
            in_specs=[
                pl.BlockSpec((None, c_in, tile_hw), lambda i, t: (i, 0, t)),
                pl.BlockSpec((c_out, c_in), lambda i, t: (0, 0)),
                pl.BlockSpec((c_out, 1), lambda i, t: (0, 0)),
            ],
            out_specs=pl.BlockSpec((None, c_out, tile_hw), lambda i, t: (i, 0, t)),
        ),
        compiler_params=pltpu.CompilerParams(
            dimension_semantics=("parallel", "parallel"),
            vmem_limit_bytes=_VMEM_LIMIT,
        ),
        cost_estimate=pl.CostEstimate(
            flops=flops, transcendentals=0, bytes_accessed=bytes_accessed
        ),
    )(x3, w_fold, bias_col)


def _pallas_whole(x3, w_fold, bias_col):
    n, c_in, hw = x3.shape
    c_out = w_fold.shape[0]
    flops = 2 * n * hw * c_in * c_out
    bytes_accessed = 4 * (n * hw * (c_in + c_out) + c_out * (c_in + 1))
    return pl.pallas_call(
        _neck_whole_kernel,
        out_shape=jax.ShapeDtypeStruct((n, c_out, hw), x3.dtype),
        grid_spec=pltpu.PrefetchScalarGridSpec(
            num_scalar_prefetch=0,
            grid=(1,),
            in_specs=[
                pl.BlockSpec((n, c_in, hw), lambda i: (0, 0, 0)),
                pl.BlockSpec((c_out, c_in), lambda i: (0, 0)),
                pl.BlockSpec((c_out, 1), lambda i: (0, 0)),
            ],
            out_specs=pl.BlockSpec((n, c_out, hw), lambda i: (0, 0, 0)),
        ),
        compiler_params=pltpu.CompilerParams(
            dimension_semantics=("arbitrary",),
            vmem_limit_bytes=_VMEM_LIMIT,
        ),
        cost_estimate=pl.CostEstimate(
            flops=flops, transcendentals=0, bytes_accessed=bytes_accessed
        ),
    )(x3, w_fold, bias_col)


@jax.jit
def _neck_level(x, w_fold, bias_col):
    """One LFDNeck level: 1x1 conv (BN-folded) + bias + ReLU, NCHW in/out."""
    n, c_in, h, w = x.shape
    hw = h * w
    c_out = w_fold.shape[0]
    x3 = x.reshape(n, c_in, hw)        # NCHW -> (N, C_in, H*W): a pure view
    mode, tile_hw = _plan_level(n, c_in, c_out, hw)
    if mode == "whole":
        y3 = _pallas_whole(x3, w_fold, bias_col)
    else:
        y3 = _pallas_tiled(x3, w_fold, bias_col, tile_hw)
    return y3.reshape(n, c_out, h, w)  # already channel-major = NCHW


# ---------------------------------------------------------------------------
# Module.
# ---------------------------------------------------------------------------
class LFDNeckPallas:
    """JAX/Pallas re-implementation of LFDNeck.

    One 1x1 ConvModule (conv -> BN -> ReLU) per input level, each fused into
    a single Pallas matmul + bias + ReLU kernel operating directly on NCHW.
    BatchNorm uses inference (running) statistics folded into the weights.
    """

    def __init__(self, in_channels, out_channels, key, eps=1e-5):
        assert isinstance(in_channels, (list, tuple))
        self.in_channels = list(in_channels)
        self.out_channels = out_channels
        self.num_ins = len(in_channels)
        self.eps = eps

        self.params = []
        keys = jax.random.split(key, self.num_ins)
        for i, c_in in enumerate(self.in_channels):
            # Conv2d(c_in, out_channels, k=1), kaiming_normal_ fan_out, relu:
            # fan_out = out_channels * 1 * 1, std = sqrt(2 / fan_out)
            std = math.sqrt(2.0 / out_channels)
            w = jax.random.normal(keys[i], (out_channels, c_in), jnp.float32) * std
            # BatchNorm2d params (inference): gamma=1, beta=0, mean=0, var=1.
            gamma = jnp.ones((out_channels,), jnp.float32)
            beta = jnp.zeros((out_channels,), jnp.float32)
            running_mean = jnp.zeros((out_channels,), jnp.float32)
            running_var = jnp.ones((out_channels,), jnp.float32)
            scale = gamma / jnp.sqrt(running_var + self.eps)
            bias = beta - running_mean * scale
            self.params.append(
                dict(
                    # Fold BN scale into the conv weight: s*(W x) == (s*W) x
                    w_fold=w * scale[:, None],   # (C_out, C_in)
                    bias=bias.reshape(-1, 1),    # (C_out, 1)
                )
            )

    def __call__(self, xs):
        assert len(xs) == self.num_ins
        outputs = []
        for i, x in enumerate(xs):
            assert x.shape[1] == self.in_channels[i]
            p = self.params[i]
            outputs.append(_neck_level(x, p["w_fold"], p["bias"]))
        return outputs


def _reference(xs, neck):
    """Pure-JAX reference of the same computation for a sanity check."""
    outs = []
    for i, x in enumerate(xs):
        p = neck.params[i]
        y = jnp.einsum("oc,nchw->nohw", p["w_fold"], x,
                       precision=jax.lax.Precision.HIGHEST)
        y = y + p["bias"].reshape(1, -1, 1, 1)
        outs.append(jnp.maximum(y, 0.0))
    return outs


if __name__ == "__main__":
    key = jax.random.PRNGKey(0)
    k_param, k_x0, k_x1, k_x2 = jax.random.split(key, 4)

    in_channels = [4, 8, 16]
    out_channels = 32

    neck = LFDNeckPallas(in_channels, out_channels, k_param)

    # FPN-like pyramid (NCHW). Levels 0/1 exercise the single-step whole-level
    # path; level 2 is large enough to exercise the HW-tiled path.
    x0 = jax.random.normal(k_x0, (2, 4, 16, 16), jnp.float32)
    x1 = jax.random.normal(k_x1, (2, 8, 8, 8), jnp.float32)
    x2 = jax.random.normal(k_x2, (2, 16, 128, 128), jnp.float32)
    xs = [x0, x1, x2]

    outs = neck(xs)
    outs = [jax.block_until_ready(o) for o in outs]

    refs = _reference(xs, neck)
    for o, r in zip(outs, refs):
        assert o.shape == r.shape
        assert jnp.max(jnp.abs(o - r)) < 1e-2

    print("KERNEL_OK")
</pallas_src>

<mosaic_0001>
module attributes {stable_mosaic.version = 11 : i64} {
  func.func @_neck_whole_kernel(%arg0: i32, %arg1: memref<2x4x256xf32, #tpu.memory_space<vmem>>, %arg2: memref<32x4xf32, #tpu.memory_space<vmem>>, %arg3: memref<32x1xf32, #tpu.memory_space<vmem>>, %arg4: memref<2x32x256xf32, #tpu.memory_space<vmem>>) attributes {dimension_semantics = [#tpu.dimension_semantics<arbitrary>], iteration_bounds = array<i64: 1>, scalar_prefetch = 0 : i64, scratch_operands = 0 : i64, tpu.core_type = #tpu.core_type<tc>, window_params = [{pipeline_mode = #tpu.pipeline_mode<synchronous>, transform_indices = @transform_0, window_bounds = array<i64: 2, 4, 256>}, {pipeline_mode = #tpu.pipeline_mode<synchronous>, transform_indices = @transform_1, window_bounds = array<i64: 32, 4>}, {pipeline_mode = #tpu.pipeline_mode<synchronous>, transform_indices = @transform_2, window_bounds = array<i64: 32, 1>}, {pipeline_mode = #tpu.pipeline_mode<synchronous>, transform_indices = @transform_3, window_bounds = array<i64: 2, 32, 256>}]} {
    %c0 = arith.constant 0 : index
    %c0_0 = arith.constant 0 : index
    %0 = vector.load %arg2[%c0, %c0_0] : memref<32x4xf32, #tpu.memory_space<vmem>>, vector<32x4xf32>
    %c0_1 = arith.constant 0 : index
    %c0_2 = arith.constant 0 : index
    %1 = vector.load %arg3[%c0_1, %c0_2] : memref<32x1xf32, #tpu.memory_space<vmem>>, vector<32x1xf32>
    %c0_3 = arith.constant 0 : index
    %c0_4 = arith.constant 0 : index
    %c0_5 = arith.constant 0 : index
    %2 = vector.load %arg1[%c0_3, %c0_4, %c0_5] : memref<2x4x256xf32, #tpu.memory_space<vmem>>, vector<1x4x256xf32>
    %3 = vector.shape_cast %2 : vector<1x4x256xf32> to vector<4x256xf32>
    %cst = arith.constant dense<0.000000e+00> : vector<32x256xf32>
    %4 = tpu.matmul %0, %3, %cst {dimension_numbers = #tpu.dot_dimension_numbers<[1], [0], [0], [1], [0, 0, 1, 1], [], []>} : vector<32x4xf32>, vector<4x256xf32>, vector<32x256xf32> -> vector<32x256xf32>
    %5 = vector.broadcast %1 : vector<32x1xf32> to vector<32x256xf32>
    %6 = arith.addf %4, %5 : vector<32x256xf32>
    %cst_6 = arith.constant 0.000000e+00 : f32
    %7 = vector.broadcast %cst_6 : f32 to vector<32x256xf32>
    %8 = arith.maximumf %6, %7 : vector<32x256xf32>
    %c0_7 = arith.constant 0 : index
    %c0_8 = arith.constant 0 : index
    %c0_9 = arith.constant 0 : index
    %9 = vector.load %arg4[%c0_7, %c0_8, %c0_9] : memref<2x32x256xf32, #tpu.memory_space<vmem>>, vector<1x32x256xf32>
    %10 = vector.shape_cast %9 : vector<1x32x256xf32> to vector<32x256xf32>
    %11 = vector.shape_cast %8 : vector<32x256xf32> to vector<1x32x256xf32>
    tpu.vector_store %arg4[%c0_7, %c0_8, %c0_9], %11 {strides = array<i32>} : memref<2x32x256xf32, #tpu.memory_space<vmem>>, vector<1x32x256xf32>,
    %c1 = arith.constant 1 : index
    %c0_10 = arith.constant 0 : index
    %c0_11 = arith.constant 0 : index
    %12 = vector.load %arg1[%c1, %c0_10, %c0_11] : memref<2x4x256xf32, #tpu.memory_space<vmem>>, vector<1x4x256xf32>
    %13 = vector.shape_cast %12 : vector<1x4x256xf32> to vector<4x256xf32>
    %cst_12 = arith.constant dense<0.000000e+00> : vector<32x256xf32>
    %14 = tpu.matmul %0, %13, %cst_12 {dimension_numbers = #tpu.dot_dimension_numbers<[1], [0], [0], [1], [0, 0, 1, 1], [], []>} : vector<32x4xf32>, vector<4x256xf32>, vector<32x256xf32> -> vector<32x256xf32>
    %15 = vector.broadcast %1 : vector<32x1xf32> to vector<32x256xf32>
    %16 = arith.addf %14, %15 : vector<32x256xf32>
    %cst_13 = arith.constant 0.000000e+00 : f32
    %17 = vector.broadcast %cst_13 : f32 to vector<32x256xf32>
    %18 = arith.maximumf %16, %17 : vector<32x256xf32>
    %c1_14 = arith.constant 1 : index
    %c0_15 = arith.constant 0 : index
    %c0_16 = arith.constant 0 : index
    %19 = vector.load %arg4[%c1_14, %c0_15, %c0_16] : memref<2x32x256xf32, #tpu.memory_space<vmem>>, vector<1x32x256xf32>
    %20 = vector.shape_cast %19 : vector<1x32x256xf32> to vector<32x256xf32>
    %21 = vector.shape_cast %18 : vector<32x256xf32> to vector<1x32x256xf32>
    tpu.vector_store %arg4[%c1_14, %c0_15, %c0_16], %21 {strides = array<i32>} : memref<2x32x256xf32, #tpu.memory_space<vmem>>, vector<1x32x256xf32>,
    return
  }
  func.func @transform_0(%arg0: i32) -> (i32, i32, i32) {
    %c0_i32 = arith.constant 0 : i32
    %c0_i32_0 = arith.constant 0 : i32
    %c0_i32_1 = arith.constant 0 : i32
    %c0_i32_2 = arith.constant 0 : i32
    return %c0_i32, %c0_i32_0, %c0_i32_1 : i32, i32, i32
  }
  func.func @transform_1(%arg0: i32) -> (i32, i32) {
    %c0_i32 = arith.constant 0 : i32
    %c0_i32_0 = arith.constant 0 : i32
    %c0_i32_1 = arith.constant 0 : i32
    return %c0_i32, %c0_i32_0 : i32, i32
  }
  func.func @transform_2(%arg0: i32) -> (i32, i32) {
    %c0_i32 = arith.constant 0 : i32
    %c0_i32_0 = arith.constant 0 : i32
    %c0_i32_1 = arith.constant 0 : i32
    return %c0_i32, %c0_i32_0 : i32, i32
  }
  func.func @transform_3(%arg0: i32) -> (i32, i32, i32) {
    %c0_i32 = arith.constant 0 : i32
    %c0_i32_0 = arith.constant 0 : i32
    %c0_i32_1 = arith.constant 0 : i32
    %c0_i32_2 = arith.constant 0 : i32
    return %c0_i32, %c0_i32_0, %c0_i32_1 : i32, i32, i32
  }
}

</mosaic_0001>

<llo_original>
// kernel: _neck_level.1
$region0: #{_neck_level.1}
  #allocation0 [shape = 'u32[]', space=smem, size = 0x4, offset = 0x4, fixed_abs, tag = 'smem constant byte address 0x4 - core index']
  #allocation1 [shape = 'u32[144,128]{1,0:T(1,128)}', space=vmem, size = 0x12000, scoped, tag = 'internal scratch']
  %s0 = inlined_call_operand.vmem [shape: f32[2,4,256], index: 0, kind: input, shape index: {}]
  %s1 = inlined_call_operand.vmem [shape: f32[32,4], index: 1, kind: input, shape index: {}]
  %s2 = inlined_call_operand.vmem [shape: f32[32,1], index: 2, kind: input, shape index: {}]
  %s3 = inlined_call_operand.vmem [shape: f32[2,32,256], index: 3, kind: output, shape index: {}]
  %s4 = sld [smem:[#allocation0]]
  $region22: #{_neck_level.1} parent=0
    _
  %s6 = ssub.s32 1, %s4
  %s7 = scalar_select 0, %s6, %s4
  // Predicated region
  $region2: #{_neck_level.1} parent=0 // pred_check
    _
  $region3: #{_neck_level.1} parent=0 // pred_check_branch
    %9 = sbr.rel (0) target = $region5
  $region4: #{_neck_level.1} parent=0 // pred_region
    _
  $region5: #{_neck_level.1} parent=0 // pred_fallthru
    _
  // Predicated region
  $region6: #{_neck_level.1} parent=0 // pred_check
    _
  $region7: #{_neck_level.1} parent=0 // pred_check_branch
    %11 = sbr.rel (0) target = $region9
  $region8: #{_neck_level.1} parent=0 // pred_region
    _
  $region9: #{_neck_level.1} parent=0 // pred_fallthru
    _
  // Predicated region
  $region10: #{_neck_level.1} parent=0 // pred_check
    _
  $region11: #{_neck_level.1} parent=0 // pred_check_branch
    %13 = sbr.rel (0) target = $region13
  $region12: #{_neck_level.1} parent=0 // pred_region
    _
  $region13: #{_neck_level.1} parent=0 // pred_fallthru
    _
  %v14 = vld [vmem:[%s1] sm:$0xff]
  %v15 = vld [vmem:[%s1 + $0x8] sm:$0xff]
  %v16 = vld [vmem:[%s1 + $0x10] sm:$0xff]
  %v17 = vld [vmem:[%s1 + $0x18] sm:$0xff]
  %v18 = vld [vmem:[%s2] sm:$0xff]
  %v19 = vld [vmem:[%s2 + $0x8] sm:$0xff]
  %v20 = vld [vmem:[%s2 + $0x10] sm:$0xff]
  %v21 = vld [vmem:[%s2 + $0x18] sm:$0xff]
  %v22 = vld [vmem:[%s0] sm:$0xff]
  %24 = vset.pattern.permute.xlu0 0
  %25 = vperm.xlu0 %24, %v18
  %v26 = vpop.permute.xlu0 %25
  %29 = vset.pattern.permute.xlu0 0
  %30 = vperm.xlu0 %29, %v19
  %v31 = vpop.permute.xlu0 %30
  %34 = vset.pattern.permute.xlu0 0
  %35 = vperm.xlu0 %34, %v20
  %v36 = vpop.permute.xlu0 %35
  %39 = vset.pattern.permute.xlu0 0
  %40 = vperm.xlu0 %39, %v21
  %v41 = vpop.permute.xlu0 %40
  %v44 = vcombine.high %v22, %v22
  %vm45 = vcmask 31744
  %v47 = vsel %vm45, %v14, 0
  %v50 = vsel %vm45, %v15, 0
  %v53 = vsel %vm45, %v16, 0
  %v56 = vsel %vm45, %v17, 0
  %vm58 = vcmask 1043456
  %v59 = vsel %vm58, %v22, 0
  %v61 = vsel %vm58, %v44, 0
  %63 = vmatprep.subr.mxu0 %v61
  %64 = vmatpush1.msra.mxu0 %v59
  %65 = vmatprep.subr.mxu0 0.0
  %66 = vmatpush1.msra.mxu0 0.0
  %67 = vmatprep.subr.mxu0 0.0
  %68 = vmatpush1.msra.mxu0 0.0
  %69 = vmatprep.subr.mxu0 0.0
  %70 = vmatpush1.msra.mxu0 0.0
  %71 = vmatprep.subr.mxu0 0.0
  %72 = vmatpush1.msra.mxu0 0.0
  %73 = vmatprep.subr.mxu0 0.0
  %74 = vmatpush1.msra.mxu0 0.0
  %75 = vmatprep.subr.mxu0 0.0
  %76 = vmatpush1.msra.mxu0 0.0
  %77 = vmatprep.subr.mxu0 0.0
  %78 = vmatpush1.msra.mxu0 0.0
  %79 = vmatprep.subr.mxu0 0.0
  %80 = vmatpush1.msra.mxu0 0.0
  %81 = vmatprep.subr.mxu0 0.0
  %82 = vmatpush1.msra.mxu0 0.0
  %83 = vmatprep.subr.mxu0 0.0
  %84 = vmatpush1.msra.mxu0 0.0
  %85 = vmatprep.subr.mxu0 0.0
  %86 = vmatpush1.msra.mxu0 0.0
  %87 = vmatprep.subr.mxu0 0.0
  %88 = vmatpush1.msra.mxu0 0.0
  %89 = vmatprep.subr.mxu0 0.0
  %90 = vmatpush1.msra.mxu0 0.0
  %91 = vmatprep.subr.mxu0 0.0
  %92 = vmatpush1.msra.mxu0 0.0
  %93 = vmatprep.subr.mxu0 0.0
  %94 = vmatpush1.msra.mxu0 0.0
  %95 = vmatprep.subr.mxu0 0.0
  %96 = vmatpush1.msra.mxu0 0.0
  %97 = vmatprep.subr.mxu0 0.0
  %98 = vmatpush1.msra.mxu0 0.0
  %99 = vmatprep.subr.mxu0 0.0
  %100 = vmatpush1.msra.mxu0 0.0
  %101 = vmatprep.subr.mxu0 0.0
  %102 = vmatpush1.msra.mxu0 0.0
  %103 = vmatprep.subr.mxu0 0.0
  %104 = vmatpush1.msra.mxu0 0.0
  %105 = vmatprep.subr.mxu0 0.0
  %106 = vmatpush1.msra.mxu0 0.0
  %107 = vmatprep.subr.mxu0 0.0
  %108 = vmatpush1.msra.mxu0 0.0
  %109 = vmatprep.subr.mxu0 0.0
  %110 = vmatpush1.msra.mxu0 0.0
  %111 = vmatprep.subr.mxu0 0.0
  %112 = vmatpush1.msra.mxu0 0.0
  %113 = vmatprep.subr.mxu0 0.0
  %114 = vmatpush1.msra.mxu0 0.0
  %115 = vmatprep.subr.mxu0 0.0
  %116 = vmatpush1.msra.mxu0 0.0
  %117 = vmatprep.subr.mxu0 0.0
  %118 = vmatpush1.msra.mxu0 0.0
  %119 = vmatprep.subr.mxu0 0.0
  %120 = vmatpush1.msra.mxu0 0.0
  %121 = vmatprep.subr.mxu0 0.0
  %122 = vmatpush1.msra.mxu0 0.0
  %123 = vmatprep.subr.mxu0 0.0
  %124 = vmatpush1.msra.mxu0 0.0
  %125 = vmatprep.subr.mxu0 0.0
  %126 = vmatpush1.msra.mxu0 0.0
  %127 = vmatprep.mubr.f32.mxu0 0.0
  %128 = vmatmul.mubr.f32.gmra.mrb[0].mxu0 %v47
  %v129 = vpop.f32.mrb[0].mxu0
  %v130 = vadd.f32 %v26, %v129
  %v131 = vpop.f32.mrb[0].mxu0
  %v132 = vadd.f32 %v26, %v131
  %133 = vmatprep.mubr.f32.mxu0 0.0
  %134 = vmatmul.mubr.f32.gmra.mrb[0].mxu0 %v50
  %v135 = vpop.f32.mrb[0].mxu0
  %v136 = vadd.f32 %v31, %v135
  %v137 = vpop.f32.mrb[0].mxu0
  %v138 = vadd.f32 %v31, %v137
  %139 = vmatprep.mubr.f32.mxu0 0.0
  %140 = vmatmul.mubr.f32.gmra.mrb[0].mxu0 %v53
  %v141 = vpop.f32.mrb[0].mxu0
  %v142 = vadd.f32 %v36, %v141
  %v143 = vpop.f32.mrb[0].mxu0
  %v144 = vadd.f32 %v36, %v143
  %145 = vmatprep.mubr.f32.mxu0 0.0
  %146 = vmatmul.mubr.f32.gmra.mrb[0].mxu0 %v56
  %v147 = vpop.f32.mrb[0].mxu0
  %v148 = vadd.f32 %v41, %v147
  %v149 = vpop.f32.mrb[0].mxu0
  %v150 = vadd.f32 %v41, %v149
  %151 = vdwg.mxu0
  %v152 = vmax.f32 %v130, 0.0
  %v153 = vmax.f32 %v132, 0.0
  %v154 = vmax.f32 %v136, 0.0
  %v155 = vmax.f32 %v138, 0.0
  %v156 = vmax.f32 %v142, 0.0
  %v157 = vmax.f32 %v144, 0.0
  %v158 = vmax.f32 %v148, 0.0
  %v159 = vmax.f32 %v150, 0.0
  %160 = vst [vmem:[%s3] sm:$0xff] %v152
  %161 = vst [vmem:[%s3 + $0x8] sm:$0xff] %v153
  %162 = vst [vmem:[%s3 + $0x10] sm:$0xff] %v154
  %163 = vst [vmem:[%s3 + $0x18] sm:$0xff] %v155
  %164 = vst [vmem:[%s3 + $0x20] sm:$0xff] %v156
  %165 = vst [vmem:[%s3 + $0x28] sm:$0xff] %v157
  %166 = vst [vmem:[%s3 + $0x30] sm:$0xff] %v158
  %167 = vst [vmem:[%s3 + $0x38] sm:$0xff] %v159
  %s168 = scalar_lea.vmem %s0, 8
  %v169 = vld [vmem:[%s168] sm:$0xff]
  %v171 = vcombine.high %v169, %v169
  %v172 = vsel %vm58, %v169, 0
  %v174 = vsel %vm58, %v171, 0
  %176 = vmatprep.subr.mxu0 %v174
  %177 = vmatpush1.msra.mxu0 %v172
  %178 = vmatprep.subr.mxu0 0.0
  %179 = vmatpush1.msra.mxu0 0.0
  %180 = vmatprep.subr.mxu0 0.0
  %181 = vmatpush1.msra.mxu0 0.0
  %182 = vmatprep.subr.mxu0 0.0
  %183 = vmatpush1.msra.mxu0 0.0
  %184 = vmatprep.subr.mxu0 0.0
  %185 = vmatpush1.msra.mxu0 0.0
  %186 = vmatprep.subr.mxu0 0.0
  %187 = vmatpush1.msra.mxu0 0.0
  %188 = vmatprep.subr.mxu0 0.0
  %189 = vmatpush1.msra.mxu0 0.0
  %190 = vmatprep.subr.mxu0 0.0
  %191 = vmatpush1.msra.mxu0 0.0
  %192 = vmatprep.subr.mxu0 0.0
  %193 = vmatpush1.msra.mxu0 0.0
  %194 = vmatprep.subr.mxu0 0.0
  %195 = vmatpush1.msra.mxu0 0.0
  %196 = vmatprep.subr.mxu0 0.0
  %197 = vmatpush1.msra.mxu0 0.0
  %198 = vmatprep.subr.mxu0 0.0
  %199 = vmatpush1.msra.mxu0 0.0
  %200 = vmatprep.subr.mxu0 0.0
  %201 = vmatpush1.msra.mxu0 0.0
  %202 = vmatprep.subr.mxu0 0.0
  %203 = vmatpush1.msra.mxu0 0.0
  %204 = vmatprep.subr.mxu0 0.0
  %205 = vmatpush1.msra.mxu0 0.0
  %206 = vmatprep.subr.mxu0 0.0
  %207 = vmatpush1.msra.mxu0 0.0
  %208 = vmatprep.subr.mxu0 0.0
  %209 = vmatpush1.msra.mxu0 0.0
  %210 = vmatprep.subr.mxu0 0.0
  %211 = vmatpush1.msra.mxu0 0.0
  %212 = vmatprep.subr.mxu0 0.0
  %213 = vmatpush1.msra.mxu0 0.0
  %214 = vmatprep.subr.mxu0 0.0
  %215 = vmatpush1.msra.mxu0 0.0
  %216 = vmatprep.subr.mxu0 0.0
  %217 = vmatpush1.msra.mxu0 0.0
  %218 = vmatprep.subr.mxu0 0.0
  %219 = vmatpush1.msra.mxu0 0.0
  %220 = vmatprep.subr.mxu0 0.0
  %221 = vmatpush1.msra.mxu0 0.0
  %222 = vmatprep.subr.mxu0 0.0
  %223 = vmatpush1.msra.mxu0 0.0
  %224 = vmatprep.subr.mxu0 0.0
  %225 = vmatpush1.msra.mxu0 0.0
  %226 = vmatprep.subr.mxu0 0.0
  %227 = vmatpush1.msra.mxu0 0.0
  %228 = vmatprep.subr.mxu0 0.0
  %229 = vmatpush1.msra.mxu0 0.0
  %230 = vmatprep.subr.mxu0 0.0
  %231 = vmatpush1.msra.mxu0 0.0
  %232 = vmatprep.subr.mxu0 0.0
  %233 = vmatpush1.msra.mxu0 0.0
  %234 = vmatprep.subr.mxu0 0.0
  %235 = vmatpush1.msra.mxu0 0.0
  %236 = vmatprep.subr.mxu0 0.0
  %237 = vmatpush1.msra.mxu0 0.0
  %238 = vmatprep.subr.mxu0 0.0
  %239 = vmatpush1.msra.mxu0 0.0
  %240 = vmatprep.mubr.f32.mxu0 0.0
  %241 = vmatmul.mubr.f32.gmra.mrb[0].mxu0 %v47
  %v242 = vpop.f32.mrb[0].mxu0
  %v243 = vadd.f32 %v26, %v242
  %v244 = vpop.f32.mrb[0].mxu0
  %v245 = vadd.f32 %v26, %v244
  %246 = vmatprep.mubr.f32.mxu0 0.0
  %247 = vmatmul.mubr.f32.gmra.mrb[0].mxu0 %v50
  %v248 = vpop.f32.mrb[0].mxu0
  %v249 = vadd.f32 %v31, %v248
  %v250 = vpop.f32.mrb[0].mxu0
  %v251 = vadd.f32 %v31, %v250
  %252 = vmatprep.mubr.f32.mxu0 0.0
  %253 = vmatmul.mubr.f32.gmra.mrb[0].mxu0 %v53
  %v254 = vpop.f32.mrb[0].mxu0
  %v255 = vadd.f32 %v36, %v254
  %v256 = vpop.f32.mrb[0].mxu0
  %v257 = vadd.f32 %v36, %v256
  %258 = vmatprep.mubr.f32.mxu0 0.0
  %259 = vmatmul.mubr.f32.gmra.mrb[0].mxu0 %v56
  %v260 = vpop.f32.mrb[0].mxu0
  %v261 = vadd.f32 %v41, %v260
  %v262 = vpop.f32.mrb[0].mxu0
  %v263 = vadd.f32 %v41, %v262
  %264 = vdwg.mxu0
  %v265 = vmax.f32 %v243, 0.0
  %v266 = vmax.f32 %v245, 0.0
  %v267 = vmax.f32 %v249, 0.0
  %v268 = vmax.f32 %v251, 0.0
  %v269 = vmax.f32 %v255, 0.0
  %v270 = vmax.f32 %v257, 0.0
  %v271 = vmax.f32 %v261, 0.0
  %v272 = vmax.f32 %v263, 0.0
  %s273 = scalar_lea.vmem %s3, 64
  %274 = vst [vmem:[%s273] sm:$0xff] %v265
  %275 = vst [vmem:[%s273 + $0x8] sm:$0xff] %v266
  %276 = vst [vmem:[%s273 + $0x10] sm:$0xff] %v267
  %277 = vst [vmem:[%s273 + $0x18] sm:$0xff] %v268
  %278 = vst [vmem:[%s273 + $0x20] sm:$0xff] %v269
  %279 = vst [vmem:[%s273 + $0x28] sm:$0xff] %v270
  %280 = vst [vmem:[%s273 + $0x30] sm:$0xff] %v271
  %281 = vst [vmem:[%s273 + $0x38] sm:$0xff] %v272
  // Predicated region
  $region14: #{_neck_level.1} parent=0 // pred_check
    _
  $region15: #{_neck_level.1} parent=0 // pred_check_branch
    %283 = sbr.rel (0) target = $region17
  $region16: #{_neck_level.1} parent=0 // pred_region
    _
  $region17: #{_neck_level.1} parent=0 // pred_fallthru
    _
  // Predicated region
  $region18: #{_neck_level.1} parent=0 // pred_check
    _
  $region19: #{_neck_level.1} parent=0 // pred_check_branch
    %285 = sbr.rel (0) target = $region21
  $region20: #{_neck_level.1} parent=0 // pred_region
    _
  $region21: #{_neck_level.1} parent=0 // pred_fallthru
    _

</llo_original>
